<compile_context>
chip_gen: v5e
topology: v5e:2x2
jax: 0.10.0
libtpu: 0.0.40
codegen_flags: <defaults>
</compile_context>

<pallas_src>
import math
from functools import partial

import jax
import jax.numpy as jnp
import numpy as np
from jax.experimental import pallas as pl
from jax.experimental.pallas import tpu as pltpu

C_PAD = 128  # lane width; all channel dims are zero-padded to this


# ---------------------------------------------------------------------------
# Fused kernel (whole layer stack; body generated from the static plan)
# ---------------------------------------------------------------------------

def _build_fused_kernel(plan, t_in):
    """plan: tuple of 'conv' / 'pool'; t_in: static input time length."""

    def kernel(x_ref, w_ref, b_ref, o_ref):
        # x_ref: (1, t_in, C_PAD)      bf16 input activation (one batch element)
        # w_ref: (Lc, 3*C_PAD, C_PAD)  bf16 conv weights, BN scale folded in
        # b_ref: (Lc, 1, C_PAD)        f32 fused bias (conv_bias * bn_scale)
        # o_ref: (1, t_out, C_PAD)     f32 output
        h = x_ref[0].astype(jnp.float32)           # (T, C_PAD) f32 epilogue dtype
        T = t_in
        li = 0
        for op in plan:
            if op == 'conv':
                # padding=1 handled in-register with two zero halo rows.
                zrow = jnp.zeros((1, C_PAD), jnp.float32)
                xp = jnp.concatenate([zrow, h, zrow], axis=0)            # (T+2, C)
                # im2col: one K=3*C_PAD MXU matmul instead of 3 tiny ones.
                xcat = jnp.concatenate(
                    [xp[0:T], xp[1:T + 1], xp[2:T + 2]], axis=1
                ).astype(jnp.bfloat16)                                    # (T, 3C)
                acc = jnp.dot(xcat, w_ref[li],
                              preferred_element_type=jnp.float32)         # (T, C)
                h = jnp.maximum(acc + b_ref[li], 0.0)                     # BN+bias+ReLU
                li += 1
            else:  # 'pool': MaxPool1d(kernel_size=2, stride=2); floor-drops odd tail
                Tn = T // 2
                h = jnp.max(h[:2 * Tn].reshape(Tn, 2, C_PAD), axis=1)
                T = Tn
        o_ref[0] = h.astype(o_ref.dtype)

    return kernel


# ---------------------------------------------------------------------------
# Parameter construction / packing
# ---------------------------------------------------------------------------

def make_feature_extractor_params(features_cfg, key):
    """Mirrors FeatureExtractor._make_layers(cfg, batch_norm=True).

    Note: the PyTorch loop iterates over *all* of cfg (including cfg[0]), so
    the first layer is Conv1d(cfg[0], cfg[0], 3, padding=1).
    """
    eps = 1e-5
    plan = []
    params = []
    in_ch = features_cfg[0]
    for layer_type in features_cfg:
        if layer_type == 'M':
            plan.append('pool')
        else:
            out_ch = layer_type
            key, kw, kb = jax.random.split(key, 3)
            # PyTorch Conv1d default init: U(-bound, bound), bound = 1/sqrt(Cin*K)
            bound = 1.0 / math.sqrt(in_ch * 3)
            # tap-major weight: w[k] has shape (Cin, Cout) == W_pt[:, :, k].T
            w = jax.random.uniform(kw, (3, in_ch, out_ch), jnp.float32,
                                   minval=-bound, maxval=bound)
            b = jax.random.uniform(kb, (out_ch,), jnp.float32,
                                   minval=-bound, maxval=bound)
            # Eval-mode BatchNorm with default stats (mean=0, var=1, gamma=1, beta=0).
            scale = jnp.full((out_ch,), 1.0 / math.sqrt(1.0 + eps), jnp.float32)
            params.append((w, b, scale))
            plan.append('conv')
            in_ch = out_ch
    length_scale = 2 ** plan.count('pool')
    return tuple(params), tuple(plan), length_scale


def _pack_conv_params(params):
    """Fold BN scale into the weights, pad channels to C_PAD, stack layers."""
    Lc = len(params)
    w_packed = jnp.zeros((Lc, 3 * C_PAD, C_PAD), jnp.float32)
    b_packed = jnp.zeros((Lc, 1, C_PAD), jnp.float32)
    for li, (w, b, scale) in enumerate(params):
        cin, cout = w.shape[1], w.shape[2]
        wf = w * scale[None, None, :]                    # fold per-channel BN scale
        for k in range(3):
            w_packed = w_packed.at[li, k * C_PAD:k * C_PAD + cin, :cout].set(wf[k])
        b_packed = b_packed.at[li, 0, :cout].set(b * scale)
    return w_packed.astype(jnp.bfloat16), b_packed


# ---------------------------------------------------------------------------
# Forward
# ---------------------------------------------------------------------------

@partial(jax.jit, static_argnames=("plan", "length_scale"))
def feature_extractor_forward(x, x_lengths, params, plan, length_scale):
    """x: (B, T, C_in) f32, x_lengths: (B,) int32 -> ((B, T', C_out), (B,))."""
    B, T0, Cin = x.shape
    Cout = params[-1][0].shape[2]

    # Static output length (MaxPool1d floor-truncates odd lengths like PyTorch).
    T_out = T0
    for op in plan:
        if op == 'pool':
            T_out //= 2

    # One-time layout plumbing: lane-dense channel pad + bf16 cast of the input.
    xp = jnp.zeros((B, T0, C_PAD), jnp.bfloat16)
    xp = xp.at[:, :, :Cin].set(x.astype(jnp.bfloat16))

    w_packed, b_packed = _pack_conv_params(params)
    kernel = _build_fused_kernel(plan, T0)

    out = pl.pallas_call(
        kernel,
        out_shape=jax.ShapeDtypeStruct((B, T_out, C_PAD), jnp.float32),
        grid_spec=pltpu.PrefetchScalarGridSpec(
            num_scalar_prefetch=0,
            grid=(B,),  # parallel over batch -> shards across v7x's 2 TCs
            in_specs=[
                pl.BlockSpec((1, T0, C_PAD), lambda b: (b, 0, 0)),
                # Weights / bias: constant block index -> resident in VMEM.
                pl.BlockSpec(w_packed.shape, lambda b: (0, 0, 0)),
                pl.BlockSpec(b_packed.shape, lambda b: (0, 0, 0)),
            ],
            out_specs=pl.BlockSpec((1, T_out, C_PAD), lambda b: (b, 0, 0)),
        ),
        compiler_params=pltpu.CompilerParams(
            dimension_semantics=("parallel",)),
    )(xp, w_packed, b_packed)

    # TODO(synk): for very long T add a time-tile grid axis (with 1-row halos)
    # so per-step VMEM stays within v7x's 64 MiB and DMA/compute can pipeline.
    y = out[:, :, :Cout]
    return y, x_lengths // length_scale


# ---------------------------------------------------------------------------
# Pure-JAX f32 reference (for correctness check)
# ---------------------------------------------------------------------------

def feature_extractor_reference(x, x_lengths, params, plan, length_scale):
    h = x
    li = 0
    for op in plan:
        if op == 'pool':
            B, T, C = h.shape
            Tn = T // 2
            h = jnp.max(h[:, :2 * Tn].reshape(B, Tn, 2, C), axis=2)
        else:
            w, b, scale = params[li]
            li += 1
            T = h.shape[1]
            hp = jnp.pad(h, ((0, 0), (1, 1), (0, 0)))
            acc = (jnp.einsum('btc,cd->btd', hp[:, 0:T], w[0])
                   + jnp.einsum('btc,cd->btd', hp[:, 1:T + 1], w[1])
                   + jnp.einsum('btc,cd->btd', hp[:, 2:T + 2], w[2]))
            h = jnp.maximum((acc + b) * scale, 0.0)
    return h, x_lengths // length_scale


# ---------------------------------------------------------------------------
# Demo
# ---------------------------------------------------------------------------

if __name__ == "__main__":
    # cfg = [in_channels, 8, 'M', 16, 'M']  -> length_scale = 4
    features_cfg = [4, 8, 'M', 16, 'M']
    B, T, C_in = 2, 16, features_cfg[0]

    key = jax.random.PRNGKey(0)
    key, kx = jax.random.split(key)
    x = jax.random.normal(kx, (B, T, C_in), dtype=jnp.float32)
    x_lengths = jnp.array([16, 12], dtype=jnp.int32)

    params, plan, length_scale = make_feature_extractor_params(features_cfg, key)

    y, y_lengths = feature_extractor_forward(x, x_lengths, params, plan,
                                             length_scale)
    jax.block_until_ready(y)
    jax.block_until_ready(y_lengths)

    y_ref, y_len_ref = feature_extractor_reference(x, x_lengths, params, plan,
                                                   length_scale)

    assert y.shape == (B, T // length_scale, 16), y.shape
    assert y_lengths.shape == (B,)
    np.testing.assert_allclose(np.asarray(y), np.asarray(y_ref),
                               rtol=5e-2, atol=5e-2)
    np.testing.assert_array_equal(np.asarray(y_lengths), np.asarray(y_len_ref))
    print("KERNEL_OK")
</pallas_src>

<mosaic_0001>
module attributes {stable_mosaic.version = 11 : i64} {
  func.func @kernel(%arg0: i32, %arg1: memref<1x16x128xbf16, #tpu.memory_space<vmem>>, %arg2: memref<3x384x128xbf16, #tpu.memory_space<vmem>>, %arg3: memref<3x1x128xf32, #tpu.memory_space<vmem>>, %arg4: memref<1x4x128xf32, #tpu.memory_space<vmem>>) attributes {dimension_semantics = [#tpu.dimension_semantics<parallel>], iteration_bounds = array<i64: 2>, scalar_prefetch = 0 : i64, scratch_operands = 0 : i64, tpu.core_type = #tpu.core_type<tc>, window_params = [{transform_indices = @transform_0, window_bounds = array<i64: 1, 16, 128>}, {pipeline_mode = #tpu.pipeline_mode<synchronous>, transform_indices = @transform_1, window_bounds = array<i64: 3, 384, 128>}, {pipeline_mode = #tpu.pipeline_mode<synchronous>, transform_indices = @transform_2, window_bounds = array<i64: 3, 1, 128>}, {transform_indices = @transform_3, window_bounds = array<i64: 1, 4, 128>}]} {
    %c0 = arith.constant 0 : index
    %c0_0 = arith.constant 0 : index
    %c0_1 = arith.constant 0 : index
    %0 = vector.load %arg1[%c0, %c0_0, %c0_1] : memref<1x16x128xbf16, #tpu.memory_space<vmem>>, vector<1x16x128xbf16>
    %1 = vector.shape_cast %0 : vector<1x16x128xbf16> to vector<16x128xbf16>
    %2 = arith.extf %1 : vector<16x128xbf16> to vector<16x128xf32>
    %cst = arith.constant 0.000000e+00 : f32
    %3 = vector.broadcast %cst : f32 to vector<1x128xf32>
    %4 = tpu.concatenate %3, %2, %3 in 0 : vector<1x128xf32>, vector<16x128xf32>, vector<1x128xf32> -> vector<18x128xf32>
    %5 = vector.extract_strided_slice %4 {offsets = [0, 0], sizes = [16, 128], strides = [1, 1]} : vector<18x128xf32> to vector<16x128xf32>
    %6 = vector.extract_strided_slice %4 {offsets = [1, 0], sizes = [16, 128], strides = [1, 1]} : vector<18x128xf32> to vector<16x128xf32>
    %7 = vector.extract_strided_slice %4 {offsets = [2, 0], sizes = [16, 128], strides = [1, 1]} : vector<18x128xf32> to vector<16x128xf32>
    %8 = tpu.concatenate %5, %6, %7 in 1 : vector<16x128xf32>, vector<16x128xf32>, vector<16x128xf32> -> vector<16x384xf32>
    %9 = arith.truncf %8 : vector<16x384xf32> to vector<16x384xbf16>
    %c0_2 = arith.constant 0 : index
    %c0_3 = arith.constant 0 : index
    %c0_4 = arith.constant 0 : index
    %10 = vector.load %arg2[%c0_2, %c0_3, %c0_4] : memref<3x384x128xbf16, #tpu.memory_space<vmem>>, vector<1x384x128xbf16>
    %11 = vector.shape_cast %10 : vector<1x384x128xbf16> to vector<384x128xbf16>
    %cst_5 = arith.constant dense<0.000000e+00> : vector<16x128xf32>
    %12 = tpu.matmul %9, %11, %cst_5 {dimension_numbers = #tpu.dot_dimension_numbers<[1], [0], [0], [1], [0, 0, 1, 1], [], []>} : vector<16x384xbf16>, vector<384x128xbf16>, vector<16x128xf32> -> vector<16x128xf32>
    %c0_6 = arith.constant 0 : index
    %c0_7 = arith.constant 0 : index
    %c0_8 = arith.constant 0 : index
    %13 = vector.load %arg3[%c0_6, %c0_7, %c0_8] : memref<3x1x128xf32, #tpu.memory_space<vmem>>, vector<1x1x128xf32>
    %14 = vector.shape_cast %13 : vector<1x1x128xf32> to vector<1x128xf32>
    %15 = vector.broadcast %14 : vector<1x128xf32> to vector<16x128xf32>
    %16 = arith.addf %12, %15 : vector<16x128xf32>
    %cst_9 = arith.constant 0.000000e+00 : f32
    %17 = vector.broadcast %cst_9 : f32 to vector<16x128xf32>
    %18 = arith.maximumf %16, %17 : vector<16x128xf32>
    %cst_10 = arith.constant 0.000000e+00 : f32
    %19 = vector.broadcast %cst_10 : f32 to vector<1x128xf32>
    %20 = tpu.concatenate %19, %18, %19 in 0 : vector<1x128xf32>, vector<16x128xf32>, vector<1x128xf32> -> vector<18x128xf32>
    %21 = vector.extract_strided_slice %20 {offsets = [0, 0], sizes = [16, 128], strides = [1, 1]} : vector<18x128xf32> to vector<16x128xf32>
    %22 = vector.extract_strided_slice %20 {offsets = [1, 0], sizes = [16, 128], strides = [1, 1]} : vector<18x128xf32> to vector<16x128xf32>
    %23 = vector.extract_strided_slice %20 {offsets = [2, 0], sizes = [16, 128], strides = [1, 1]} : vector<18x128xf32> to vector<16x128xf32>
    %24 = tpu.concatenate %21, %22, %23 in 1 : vector<16x128xf32>, vector<16x128xf32>, vector<16x128xf32> -> vector<16x384xf32>
    %25 = arith.truncf %24 : vector<16x384xf32> to vector<16x384xbf16>
    %c1 = arith.constant 1 : index
    %c0_11 = arith.constant 0 : index
    %c0_12 = arith.constant 0 : index
    %26 = vector.load %arg2[%c1, %c0_11, %c0_12] : memref<3x384x128xbf16, #tpu.memory_space<vmem>>, vector<1x384x128xbf16>
    %27 = vector.shape_cast %26 : vector<1x384x128xbf16> to vector<384x128xbf16>
    %cst_13 = arith.constant dense<0.000000e+00> : vector<16x128xf32>
    %28 = tpu.matmul %25, %27, %cst_13 {dimension_numbers = #tpu.dot_dimension_numbers<[1], [0], [0], [1], [0, 0, 1, 1], [], []>} : vector<16x384xbf16>, vector<384x128xbf16>, vector<16x128xf32> -> vector<16x128xf32>
    %c1_14 = arith.constant 1 : index
    %c0_15 = arith.constant 0 : index
    %c0_16 = arith.constant 0 : index
    %29 = vector.load %arg3[%c1_14, %c0_15, %c0_16] : memref<3x1x128xf32, #tpu.memory_space<vmem>>, vector<1x1x128xf32>
    %30 = vector.shape_cast %29 : vector<1x1x128xf32> to vector<1x128xf32>
    %31 = vector.broadcast %30 : vector<1x128xf32> to vector<16x128xf32>
    %32 = arith.addf %28, %31 : vector<16x128xf32>
    %cst_17 = arith.constant 0.000000e+00 : f32
    %33 = vector.broadcast %cst_17 : f32 to vector<16x128xf32>
    %34 = arith.maximumf %32, %33 : vector<16x128xf32>
    %35 = vector.shape_cast %34 : vector<16x128xf32> to vector<8x2x128xf32>
    %cst_18 = arith.constant dense<0xFF800000> : vector<8x128xf32>
    %36 = vector.multi_reduction <maximumf>, %35, %cst_18 [1] : vector<8x2x128xf32> to vector<8x128xf32>
    %cst_19 = arith.constant 0.000000e+00 : f32
    %37 = vector.broadcast %cst_19 : f32 to vector<1x128xf32>
    %38 = tpu.concatenate %37, %36, %37 in 0 : vector<1x128xf32>, vector<8x128xf32>, vector<1x128xf32> -> vector<10x128xf32>
    %39 = vector.extract_strided_slice %38 {offsets = [0, 0], sizes = [8, 128], strides = [1, 1]} : vector<10x128xf32> to vector<8x128xf32>
    %40 = vector.extract_strided_slice %38 {offsets = [1, 0], sizes = [8, 128], strides = [1, 1]} : vector<10x128xf32> to vector<8x128xf32>
    %41 = vector.extract_strided_slice %38 {offsets = [2, 0], sizes = [8, 128], strides = [1, 1]} : vector<10x128xf32> to vector<8x128xf32>
    %42 = tpu.concatenate %39, %40, %41 in 1 : vector<8x128xf32>, vector<8x128xf32>, vector<8x128xf32> -> vector<8x384xf32>
    %43 = arith.truncf %42 : vector<8x384xf32> to vector<8x384xbf16>
    %c2 = arith.constant 2 : index
    %c0_20 = arith.constant 0 : index
    %c0_21 = arith.constant 0 : index
    %44 = vector.load %arg2[%c2, %c0_20, %c0_21] : memref<3x384x128xbf16, #tpu.memory_space<vmem>>, vector<1x384x128xbf16>
    %45 = vector.shape_cast %44 : vector<1x384x128xbf16> to vector<384x128xbf16>
    %cst_22 = arith.constant dense<0.000000e+00> : vector<8x128xf32>
    %46 = tpu.matmul %43, %45, %cst_22 {dimension_numbers = #tpu.dot_dimension_numbers<[1], [0], [0], [1], [0, 0, 1, 1], [], []>} : vector<8x384xbf16>, vector<384x128xbf16>, vector<8x128xf32> -> vector<8x128xf32>
    %c2_23 = arith.constant 2 : index
    %c0_24 = arith.constant 0 : index
    %c0_25 = arith.constant 0 : index
    %47 = vector.load %arg3[%c2_23, %c0_24, %c0_25] : memref<3x1x128xf32, #tpu.memory_space<vmem>>, vector<1x1x128xf32>
    %48 = vector.shape_cast %47 : vector<1x1x128xf32> to vector<1x128xf32>
    %49 = vector.broadcast %48 : vector<1x128xf32> to vector<8x128xf32>
    %50 = arith.addf %46, %49 : vector<8x128xf32>
    %cst_26 = arith.constant 0.000000e+00 : f32
    %51 = vector.broadcast %cst_26 : f32 to vector<8x128xf32>
    %52 = arith.maximumf %50, %51 : vector<8x128xf32>
    %53 = vector.shape_cast %52 : vector<8x128xf32> to vector<4x2x128xf32>
    %cst_27 = arith.constant dense<0xFF800000> : vector<4x128xf32>
    %54 = vector.multi_reduction <maximumf>, %53, %cst_27 [1] : vector<4x2x128xf32> to vector<4x128xf32>
    %c0_28 = arith.constant 0 : index
    %c0_29 = arith.constant 0 : index
    %c0_30 = arith.constant 0 : index
    %55 = vector.load %arg4[%c0_28, %c0_29, %c0_30] : memref<1x4x128xf32, #tpu.memory_space<vmem>>, vector<1x4x128xf32>
    %56 = vector.shape_cast %55 : vector<1x4x128xf32> to vector<4x128xf32>
    %57 = vector.shape_cast %54 : vector<4x128xf32> to vector<1x4x128xf32>
    tpu.vector_store %arg4[%c0_28, %c0_29, %c0_30], %57 {strides = array<i32>} : memref<1x4x128xf32, #tpu.memory_space<vmem>>, vector<1x4x128xf32>,
    return
  }
  func.func @transform_0(%arg0: i32) -> (i32, i32, i32) {
    %c0_i32 = arith.constant 0 : i32
    %c0_i32_0 = arith.constant 0 : i32
    %c0_i32_1 = arith.constant 0 : i32
    return %arg0, %c0_i32, %c0_i32_0 : i32, i32, i32
  }
  func.func @transform_1(%arg0: i32) -> (i32, i32, i32) {
    %c0_i32 = arith.constant 0 : i32
    %c0_i32_0 = arith.constant 0 : i32
    %c0_i32_1 = arith.constant 0 : i32
    %c0_i32_2 = arith.constant 0 : i32
    return %c0_i32, %c0_i32_0, %c0_i32_1 : i32, i32, i32
  }
  func.func @transform_2(%arg0: i32) -> (i32, i32, i32) {
    %c0_i32 = arith.constant 0 : i32
    %c0_i32_0 = arith.constant 0 : i32
    %c0_i32_1 = arith.constant 0 : i32
    %c0_i32_2 = arith.constant 0 : i32
    return %c0_i32, %c0_i32_0, %c0_i32_1 : i32, i32, i32
  }
  func.func @transform_3(%arg0: i32) -> (i32, i32, i32) {
    %c0_i32 = arith.constant 0 : i32
    %c0_i32_0 = arith.constant 0 : i32
    %c0_i32_1 = arith.constant 0 : i32
    return %arg0, %c0_i32, %c0_i32_0 : i32, i32, i32
  }
}

</mosaic_0001>

<llo_original>
// kernel: feature_extractor_forward.1
$region0: #{feature_extractor_forward.1}
  #allocation0 [shape = 'u32[]', space=smem, size = 0x4, offset = 0x4, fixed_abs, tag = 'smem constant byte address 0x4 - core index']
  #allocation1 [shape = 'u32[72,128]{1,0:T(1,128)}', space=vmem, size = 0x9000, scoped, tag = 'internal scratch']
  %s0 = inlined_call_operand.vmem [shape: bf16[2,16,128], index: 0, kind: input, shape index: {}]
  %s1 = inlined_call_operand.vmem [shape: bf16[3,384,128], index: 1, kind: input, shape index: {}]
  %s2 = inlined_call_operand.vmem [shape: f32[3,1,128], index: 2, kind: input, shape index: {}]
  %s3 = inlined_call_operand.hbm [shape: f32[2,4,128], index: 3, kind: output, shape index: {}]
  %s4 = sld [smem:[#allocation0]]
  $region45: #{feature_extractor_forward.1} parent=0
    _
  %s6 = ssub.s32 1, %s4
  %s7 = scalar_select 0, %s6, %s4
  $region1: #{feature_extractor_forward.1} parent=0
    #allocation2 [shape = 'u8[4096]{0}', space=vmem, size = 0x1000, scoped, tag = 'output window, operand 0']
    #allocation3 [shape = 's32[2]{0}', space=sflag, size = 0x8, scoped, tag = 'scoped memory for feature_extractor_forward.1']
    %8 = vsyncpa [#allocation3], 0
    %s9 = scalar_lea.sflag [#allocation3], 1
    %10 = vsyncpa %s9, 0
    loop: start=0, step=1, limit=4
    $region2: #{feature_extractor_forward.1} parent=1 // loop_pre_header
      _
    $region3: #{feature_extractor_forward.1} parent=1 // loop_header
      %s12 = sphi 0, %s16
      %p13 = scmp.ge.s32.totalorder %s12, 4
      %s22 = sphi 0, %s24
      %s25 = sphi 0, %s22
      %s26 = sphi 0, %s25
      %s42 = sphi 0, %s26
      %s46 = sphi 0, %s46
      %s48 = sphi 0, %s46
      %s49 = sphi 0, %s48
      %s63 = sphi 0, %s49
      %s67 = sphi 0, %s67
      %s69 = sphi 0, %s67
      %s70 = sphi 0, %s69
      %s84 = sphi 0, %s70
      %s90 = sphi 0, %s92
      %s93 = sphi 0, %s90
      %s94 = sphi 0, %s93
      %s110 = sphi 0, %s94
    $region4: #{feature_extractor_forward.1} parent=1 // loop_header_branch
      %15 = sbr.rel (%p13) target = $region8
    $region5: #{feature_extractor_forward.1} parent=1 // loop_body
      %s17 = ssub.s32 %s12, 1
      %s18 = ssub.s32 %s12, 2
      %s19 = sadd.s32 %s12, 1
      %s20 = ssub.s32 %s12, %s19
      %p21 = scmp.eq.s32.totalorder %s20, 0
      %s23 = sadd.s32 %s22, 1
      %s24 = scalar_select %p21, %s22, %s23
      %p27 = pneg %p21
      %p28 = scmp.eq.s32.totalorder %s12, 1
      %p29 = por %p27, %p28
      %p30 = scmp.ne.s32.totalorder %s22, %s25
      %p31 = scmp.eq.s32.totalorder %s12, 0
      %p32 = por %p30, %p31
      %p33 = scmp.ne.s32.totalorder %s22, %s25
      %p34 = scmp.eq.s32.totalorder %s17, 1
      %p35 = por %p33, %p34
      %p36 = scmp.ne.s32.totalorder %s25, %s26
      %p37 = scmp.eq.s32.totalorder %s17, 0
      %p38 = por %p36, %p37
      %p39 = scmp.ne.s32.totalorder %s25, %s26
      %p40 = scmp.eq.s32.totalorder %s18, 1
      %p41 = por %p39, %p40
      %p43 = scmp.ne.s32.totalorder %s26, %s42
      %p44 = scmp.eq.s32.totalorder %s18, 0
      %p45 = por %p43, %p44
      %s47 = sadd.s32 %s46, 1
      %p50 = scmp.eq.s32.totalorder %s12, 1
      %p51 = scmp.ne.s32.totalorder %s46, %s48
      %p52 = scmp.eq.s32.totalorder %s12, 0
      %p53 = por %p51, %p52
      %p54 = scmp.ne.s32.totalorder %s46, %s48
      %p55 = scmp.eq.s32.totalorder %s17, 1
      %p56 = por %p54, %p55
      %p57 = scmp.ne.s32.totalorder %s48, %s49
      %p58 = scmp.eq.s32.totalorder %s17, 0
      %p59 = por %p57, %p58
      %p60 = scmp.ne.s32.totalorder %s48, %s49
      %p61 = scmp.eq.s32.totalorder %s18, 1
      %p62 = por %p60, %p61
      %p64 = scmp.ne.s32.totalorder %s49, %s63
      %p65 = scmp.eq.s32.totalorder %s18, 0
      %p66 = por %p64, %p65
      %s68 = sadd.s32 %s67, 1
      %p71 = scmp.eq.s32.totalorder %s12, 1
      %p72 = scmp.ne.s32.totalorder %s67, %s69
      %p73 = scmp.eq.s32.totalorder %s12, 0
      %p74 = por %p72, %p73
      %p75 = scmp.ne.s32.totalorder %s67, %s69
      %p76 = scmp.eq.s32.totalorder %s17, 1
      %p77 = por %p75, %p76
      %p78 = scmp.ne.s32.totalorder %s69, %s70
      %p79 = scmp.eq.s32.totalorder %s17, 0
      %p80 = por %p78, %p79
      %p81 = scmp.ne.s32.totalorder %s69, %s70
      %p82 = scmp.eq.s32.totalorder %s18, 1
      %p83 = por %p81, %p82
      %p85 = scmp.ne.s32.totalorder %s70, %s84
      %p86 = scmp.eq.s32.totalorder %s18, 0
      %p87 = por %p85, %p86
      %s88 = ssub.s32 %s12, %s19
      %p89 = scmp.eq.s32.totalorder %s88, 0
      %s91 = sadd.s32 %s90, 1
      %s92 = scalar_select %p89, %s90, %s91
      %p95 = pneg %p89
      %p96 = scmp.eq.s32.totalorder %s12, 1
      %p97 = por %p95, %p96
      %p98 = scmp.ne.s32.totalorder %s90, %s93
      %p99 = scmp.eq.s32.totalorder %s12, 0
      %p100 = por %p98, %p99
      %p101 = scmp.ne.s32.totalorder %s90, %s93
      %p102 = scmp.eq.s32.totalorder %s17, 1
      %p103 = por %p101, %p102
      %p104 = scmp.ne.s32.totalorder %s93, %s94
      %p105 = scmp.eq.s32.totalorder %s17, 0
      %p106 = por %p104, %p105
      %p107 = scmp.ne.s32.totalorder %s93, %s94
      %p108 = scmp.eq.s32.totalorder %s18, 1
      %p109 = por %p107, %p108
      %p111 = scmp.ne.s32.totalorder %s94, %s110
      %p112 = scmp.eq.s32.totalorder %s18, 0
      %p113 = por %p111, %p112
      %p114 = scmp.le.s32.totalorder 1, %s12
      %p115 = scmp.lt.s32.totalorder %s12, 3
      %p116 = pnand %p114, %p115
      %p117 = pneg %p116
      // Predicated region
      $region9: #{feature_extractor_forward.1} parent=5 // pred_check
        _
      $region10: #{feature_extractor_forward.1} parent=5 // pred_check_branch
        %119 = sbr.rel (%p116) target = $region12
      $region11: #{feature_extractor_forward.1} parent=5 // pred_region
        %s120 = ssub.s32 %s12, 1
        // Predicated region
        $region13: #{feature_extractor_forward.1} parent=11 // pred_check
          %p121 = pneg %p59
        $region14: #{feature_extractor_forward.1} parent=11 // pred_check_branch
          %123 = sbr.rel (%p121) target = $region16
        $region15: #{feature_extractor_forward.1} parent=11 // pred_region
          _
        $region16: #{feature_extractor_forward.1} parent=11 // pred_fallthru
          _
        // Predicated region
        $region17: #{feature_extractor_forward.1} parent=11 // pred_check
          %p124 = pneg %p80
        $region18: #{feature_extractor_forward.1} parent=11 // pred_check_branch
          %126 = sbr.rel (%p124) target = $region20
        $region19: #{feature_extractor_forward.1} parent=11 // pred_region
          _
        $region20: #{feature_extractor_forward.1} parent=11 // pred_fallthru
          _
      $region12: #{feature_extractor_forward.1} parent=5 // pred_fallthru
        _
      %p127 = scmp.lt.s32.totalorder %s12, 2
      // Predicated region
      $region21: #{feature_extractor_forward.1} parent=5 // pred_check
        %p128 = pneg %p127
      $region22: #{feature_extractor_forward.1} parent=5 // pred_check_branch
        %130 = sbr.rel (%p128) target = $region24
      $region23: #{feature_extractor_forward.1} parent=5 // pred_region
        // Predicated region
        $region25: #{feature_extractor_forward.1} parent=23 // pred_check
          %p131 = pneg %p32
        $region26: #{feature_extractor_forward.1} parent=23 // pred_check_branch
          %133 = sbr.rel (%p131) target = $region28
        $region27: #{feature_extractor_forward.1} parent=23 // pred_region
          %p134 = scmp.lt.s32.totalorder %s12, 1
          %s135 = scalar_select %p134, %s12, 1
          %s136 = smul.addr %s135, 2
          %s137 = smul.addr %s136, 4
          %s138 = scalar_lea.vmem %s0, %s137
        $region28: #{feature_extractor_forward.1} parent=23 // pred_fallthru
          _
      $region24: #{feature_extractor_forward.1} parent=5 // pred_fallthru
        _
      %p139 = scmp.le.s32.totalorder 1, %s12
      %p140 = scmp.lt.s32.totalorder %s12, 3
      %p141 = pnand %p139, %p140
      %p142 = pneg %p141
      // Predicated region
      $region29: #{feature_extractor_forward.1} parent=5 // pred_check
        _
      $region30: #{feature_extractor_forward.1} parent=5 // pred_check_branch
        %144 = sbr.rel (%p141) target = $region32
      $region31: #{feature_extractor_forward.1} parent=5 // pred_region
        %s145 = ssub.s32 %s12, 1
        %p146 = scmp.lt.s32.totalorder %s17, 1
        %s147 = scalar_select %p146, %s17, 1
        %s148 = smul.addr %s147, 2
        %s149 = smul.addr %s148, 4
        %s150 = scalar_lea.vmem %s0, %s149
        %p151 = pneg %p38
        %p152 = pneg %p35
        %p153 = pneg %p59
        %p154 = pneg %p56
        %p155 = pneg %p80
        %p156 = pneg %p77
        %p157 = pneg %p106
        %p158 = pneg %p103
        %s159 = sand.u32 %s93, 1
        %s160 = scalar_lea.sflag [#allocation3], %s159
        %s161 = sand.u32 %s93, 1
        %s162 = smul.addr %s161, 4
        %s163 = scalar_lea.vmem [#allocation2], %s162
        %p164 = scmp.lt.s32.totalorder %s17, 1
        %s165 = scalar_select %p164, %s17, 1
        %s166 = smul.addr %s165, 2
        %s167 = smul.addr %s166, 4
        %s168 = scalar_lea.vmem %s0, %s167
        %v169 = vld [vmem:[%s168] sm:$0xf]
        %v170 = vld [vmem:[%s168 + $0x4] sm:$0xf]
        %v171 = vunpack.c.l.bf16 %v169
        %v172 = vunpack.c.l.bf16 %v170
        %vm175 = vcmask 1040384
        %v176 = vrot.slane %v171, 7
        %v177 = vrot.slane %v172, 7
        %v178 = vsel %vm175, %v176, %v177
        %v182 = vsel %vm175, 0.0, %v176
        %v183 = vsel %vm175, %v177, 0.0
        %vm186 = vcmask 1046528
        %v187 = vrot.slane %v182, 1
        %v188 = vrot.slane %v178, 1
        %v189 = vsel %vm186, %v187, %v188
        %v190 = vrot.slane %v183, 1
        %v191 = vsel %vm186, %v188, %v190
        %vm194 = vcmask 1045504
        %v195 = vrot.slane %v182, 2
        %v196 = vrot.slane %v178, 2
        %v197 = vsel %vm194, %v195, %v196
        %v198 = vrot.slane %v183, 2
        %v199 = vsel %vm194, %v196, %v198
        %v202 = vpack.c.bf16 %v178, %v182
        %v203 = vpack.c.bf16 %v191, %v189
        %v204 = vpack.c.bf16 %v199, %v197
        %v205 = vld [vmem:[%s1] sm:$0xf]
        %v206 = vld [vmem:[%s1 + $0x4] sm:$0xf]
        %v207 = vld [vmem:[%s1 + $0x8] sm:$0xf]
        %v208 = vld [vmem:[%s1 + $0xc] sm:$0xf]
        %v209 = vld [vmem:[%s1 + $0x10] sm:$0xf]
        %v210 = vld [vmem:[%s1 + $0x14] sm:$0xf]
        %v211 = vld [vmem:[%s1 + $0x18] sm:$0xf]
        %v212 = vld [vmem:[%s1 + $0x1c] sm:$0xf]
        %v213 = vld [vmem:[%s1 + $0x20] sm:$0xf]
        %v214 = vld [vmem:[%s1 + $0x24] sm:$0xf]
        %v215 = vld [vmem:[%s1 + $0x28] sm:$0xf]
        %v216 = vld [vmem:[%s1 + $0x2c] sm:$0xf]
        %v217 = vld [vmem:[%s1 + $0x30] sm:$0xf]
        %v218 = vld [vmem:[%s1 + $0x34] sm:$0xf]
        %v219 = vld [vmem:[%s1 + $0x38] sm:$0xf]
        %v220 = vld [vmem:[%s1 + $0x3c] sm:$0xf]
        %v221 = vld [vmem:[%s1 + $0x40] sm:$0xf]
        %v222 = vld [vmem:[%s1 + $0x44] sm:$0xf]
        %v223 = vld [vmem:[%s1 + $0x48] sm:$0xf]
        %v224 = vld [vmem:[%s1 + $0x4c] sm:$0xf]
        %v225 = vld [vmem:[%s1 + $0x50] sm:$0xf]
        %v226 = vld [vmem:[%s1 + $0x54] sm:$0xf]
        %v227 = vld [vmem:[%s1 + $0x58] sm:$0xf]
        %v228 = vld [vmem:[%s1 + $0x5c] sm:$0xf]
        %v229 = vld [vmem:[%s1 + $0x60] sm:$0xf]
        %v230 = vld [vmem:[%s1 + $0x64] sm:$0xf]
        %v231 = vld [vmem:[%s1 + $0x68] sm:$0xf]
        %v232 = vld [vmem:[%s1 + $0x6c] sm:$0xf]
        %v233 = vld [vmem:[%s1 + $0x70] sm:$0xf]
        %v234 = vld [vmem:[%s1 + $0x74] sm:$0xf]
        %v235 = vld [vmem:[%s1 + $0x78] sm:$0xf]
        %v236 = vld [vmem:[%s1 + $0x7c] sm:$0xf]
        %v237 = vld [vmem:[%s1 + $0x80] sm:$0xf]
        %v238 = vld [vmem:[%s1 + $0x84] sm:$0xf]
        %v239 = vld [vmem:[%s1 + $0x88] sm:$0xf]
        %v240 = vld [vmem:[%s1 + $0x8c] sm:$0xf]
        %v241 = vld [vmem:[%s1 + $0x90] sm:$0xf]
        %v242 = vld [vmem:[%s1 + $0x94] sm:$0xf]
        %v243 = vld [vmem:[%s1 + $0x98] sm:$0xf]
        %v244 = vld [vmem:[%s1 + $0x9c] sm:$0xf]
        %v245 = vld [vmem:[%s1 + $0xa0] sm:$0xf]
        %v246 = vld [vmem:[%s1 + $0xa4] sm:$0xf]
        %v247 = vld [vmem:[%s1 + $0xa8] sm:$0xf]
        %v248 = vld [vmem:[%s1 + $0xac] sm:$0xf]
        %v249 = vld [vmem:[%s1 + $0xb0] sm:$0xf]
        %v250 = vld [vmem:[%s1 + $0xb4] sm:$0xf]
        %v251 = vld [vmem:[%s1 + $0xb8] sm:$0xf]
        %v252 = vld [vmem:[%s1 + $0xbc] sm:$0xf]
        %v253 = vld [vmem:[%s2] sm:$0x1]
        %v255 = vperm.slane %v253, 0
        %v305 = vunpack.c.l.b16 %v205
        %v306 = vunpack.c.l.b16 %v206
        %v307 = vunpack.c.l.b16 %v207
        %v308 = vunpack.c.l.b16 %v208
        %v309 = vunpack.c.l.b16 %v209
        %v310 = vunpack.c.l.b16 %v210
        %v311 = vunpack.c.l.b16 %v211
        %v312 = vunpack.c.l.b16 %v212
        %v313 = vunpack.c.l.b16 %v213
        %v314 = vunpack.c.l.b16 %v214
        %v315 = vunpack.c.l.b16 %v215
        %v316 = vunpack.c.l.b16 %v216
        %v317 = vunpack.c.l.b16 %v217
        %v318 = vunpack.c.l.b16 %v218
        %v319 = vunpack.c.l.b16 %v219
        %v320 = vunpack.c.l.b16 %v220
        %v321 = vunpack.c.l.b16 %v221
        %v322 = vunpack.c.l.b16 %v222
        %v323 = vunpack.c.l.b16 %v223
        %v324 = vunpack.c.l.b16 %v224
        %v325 = vunpack.c.l.b16 %v225
        %v326 = vunpack.c.l.b16 %v226
        %v327 = vunpack.c.l.b16 %v227
        %v328 = vunpack.c.l.b16 %v228
        %v329 = vunpack.c.l.b16 %v229
        %v330 = vunpack.c.l.b16 %v230
        %v331 = vunpack.c.l.b16 %v231
        %v332 = vunpack.c.l.b16 %v232
        %v333 = vunpack.c.l.b16 %v233
        %v334 = vunpack.c.l.b16 %v234
        %v335 = vunpack.c.l.b16 %v235
        %v336 = vunpack.c.l.b16 %v236
        %v337 = vunpack.c.l.b16 %v237
        %v338 = vunpack.c.l.b16 %v238
        %v339 = vunpack.c.l.b16 %v239
        %v340 = vunpack.c.l.b16 %v240
        %v341 = vunpack.c.l.b16 %v241
        %v342 = vunpack.c.l.b16 %v242
        %v343 = vunpack.c.l.b16 %v243
        %v344 = vunpack.c.l.b16 %v244
        %v345 = vunpack.c.l.b16 %v245
        %v346 = vunpack.c.l.b16 %v246
        %v347 = vunpack.c.l.b16 %v247
        %v348 = vunpack.c.l.b16 %v248
        %v349 = vunpack.c.l.b16 %v249
        %v350 = vunpack.c.l.b16 %v250
        %v351 = vunpack.c.l.b16 %v251
        %v352 = vunpack.c.l.b16 %v252
        %v353 = vpack.c.b16 %v306, %v305
        %v354 = vpack.c.b16 %v308, %v307
        %v355 = vpack.c.b16 %v310, %v309
        %v356 = vpack.c.b16 %v312, %v311
        %v357 = vpack.c.b16 %v314, %v313
        %v358 = vpack.c.b16 %v316, %v315
        %v359 = vpack.c.b16 %v318, %v317
        %v360 = vpack.c.b16 %v320, %v319
        %v361 = vpack.c.b16 %v322, %v321
        %v362 = vpack.c.b16 %v324, %v323
        %v363 = vpack.c.b16 %v326, %v325
        %v364 = vpack.c.b16 %v328, %v327
        %v365 = vpack.c.b16 %v330, %v329
        %v366 = vpack.c.b16 %v332, %v331
        %v367 = vpack.c.b16 %v334, %v333
        %v368 = vpack.c.b16 %v336, %v335
        %v369 = vpack.c.b16 %v338, %v337
        %v370 = vpack.c.b16 %v340, %v339
        %v371 = vpack.c.b16 %v342, %v341
        %v372 = vpack.c.b16 %v344, %v343
        %v373 = vpack.c.b16 %v346, %v345
        %v374 = vpack.c.b16 %v348, %v347
        %v375 = vpack.c.b16 %v350, %v349
        %v376 = vpack.c.b16 %v352, %v351
        %401 = vmatpush.bf16.msra.mxu0 %v360
        %402 = vmatpush.bf16.msra.mxu0 %v359
        %403 = vmatpush.bf16.msra.mxu0 %v358
        %404 = vmatpush.bf16.msra.mxu0 %v357
        %405 = vmatpush.bf16.msra.mxu0 %v356
        %406 = vmatpush.bf16.msra.mxu0 %v355
        %407 = vmatpush.bf16.msra.mxu0 %v354
        %408 = vmatpush.bf16.msra.mxu0 %v353
        %409 = vmatmul.bf16.gmra.mxu0 %v202
        %v410 = vpop.f32.mrf.mxu0
        %v411 = vadd.f32 %v255, %v410
        %v412 = vpop.f32.mrf.mxu0
        %v413 = vadd.f32 %v255, %v412
        %414 = vdwg.mxu0
        %415 = vmatpush.bf16.msra.mxu0 %v368
        %416 = vmatpush.bf16.msra.mxu0 %v367
        %417 = vmatpush.bf16.msra.mxu0 %v366
        %418 = vmatpush.bf16.msra.mxu0 %v365
        %419 = vmatpush.bf16.msra.mxu0 %v364
        %420 = vmatpush.bf16.msra.mxu0 %v363
        %421 = vmatpush.bf16.msra.mxu0 %v362
        %422 = vmatpush.bf16.msra.mxu0 %v361
        %423 = vmatmul.bf16.gmra.mxu0 %v203
        %v424 = vpop.f32.mrf.mxu0
        %v425 = vadd.f32 %v411, %v424
        %v426 = vpop.f32.mrf.mxu0
        %v427 = vadd.f32 %v413, %v426
        %428 = vdwg.mxu0
        %429 = vmatpush.bf16.msra.mxu0 %v376
        %430 = vmatpush.bf16.msra.mxu0 %v375
        %431 = vmatpush.bf16.msra.mxu0 %v374
        %432 = vmatpush.bf16.msra.mxu0 %v373
        %433 = vmatpush.bf16.msra.mxu0 %v372
        %434 = vmatpush.bf16.msra.mxu0 %v371
        %435 = vmatpush.bf16.msra.mxu0 %v370
        %436 = vmatpush.bf16.msra.mxu0 %v369
        %437 = vmatmul.bf16.gmra.mxu0 %v204
        %v438 = vpop.f32.mrf.mxu0
        %v439 = vadd.f32 %v425, %v438
        %v440 = vpop.f32.mrf.mxu0
        %v441 = vadd.f32 %v427, %v440
        %442 = vdwg.mxu0
        %v443 = vmax.f32 %v439, 0.0
        %v444 = vmax.f32 %v441, 0.0
        %v447 = vrot.slane %v443, 7
        %v448 = vrot.slane %v444, 7
        %v449 = vsel %vm175, %v447, %v448
        %v453 = vsel %vm175, 0.0, %v447
        %v454 = vsel %vm175, %v448, 0.0
        %v457 = vrot.slane %v453, 1
        %v458 = vrot.slane %v449, 1
        %v459 = vsel %vm186, %v457, %v458
        %v460 = vrot.slane %v454, 1
        %v461 = vsel %vm186, %v458, %v460
        %v464 = vrot.slane %v453, 2
        %v465 = vrot.slane %v449, 2
        %v466 = vsel %vm194, %v464, %v465
        %v467 = vrot.slane %v454, 2
        %v468 = vsel %vm194, %v465, %v467
        %v471 = vpack.c.bf16 %v449, %v453
        %v472 = vpack.c.bf16 %v461, %v459
        %v473 = vpack.c.bf16 %v468, %v466
        %s474 = scalar_lea.vmem %s1, 192
        %v475 = vld [vmem:[%s474] sm:$0xf]
        %v476 = vld [vmem:[%s474 + $0x4] sm:$0xf]
        %v477 = vld [vmem:[%s474 + $0x8] sm:$0xf]
        %v478 = vld [vmem:[%s474 + $0xc] sm:$0xf]
        %v479 = vld [vmem:[%s474 + $0x10] sm:$0xf]
        %v480 = vld [vmem:[%s474 + $0x14] sm:$0xf]
        %v481 = vld [vmem:[%s474 + $0x18] sm:$0xf]
        %v482 = vld [vmem:[%s474 + $0x1c] sm:$0xf]
        %v483 = vld [vmem:[%s474 + $0x20] sm:$0xf]
        %v484 = vld [vmem:[%s474 + $0x24] sm:$0xf]
        %v485 = vld [vmem:[%s474 + $0x28] sm:$0xf]
        %v486 = vld [vmem:[%s474 + $0x2c] sm:$0xf]
        %v487 = vld [vmem:[%s474 + $0x30] sm:$0xf]
        %v488 = vld [vmem:[%s474 + $0x34] sm:$0xf]
        %v489 = vld [vmem:[%s474 + $0x38] sm:$0xf]
        %v490 = vld [vmem:[%s474 + $0x3c] sm:$0xf]
        %v491 = vld [vmem:[%s474 + $0x40] sm:$0xf]
        %v492 = vld [vmem:[%s474 + $0x44] sm:$0xf]
        %v493 = vld [vmem:[%s474 + $0x48] sm:$0xf]
        %v494 = vld [vmem:[%s474 + $0x4c] sm:$0xf]
        %v495 = vld [vmem:[%s474 + $0x50] sm:$0xf]
        %v496 = vld [vmem:[%s474 + $0x54] sm:$0xf]
        %v497 = vld [vmem:[%s474 + $0x58] sm:$0xf]
        %v498 = vld [vmem:[%s474 + $0x5c] sm:$0xf]
        %v499 = vld [vmem:[%s474 + $0x60] sm:$0xf]
        %v500 = vld [vmem:[%s474 + $0x64] sm:$0xf]
        %v501 = vld [vmem:[%s474 + $0x68] sm:$0xf]
        %v502 = vld [vmem:[%s474 + $0x6c] sm:$0xf]
        %v503 = vld [vmem:[%s474 + $0x70] sm:$0xf]
        %v504 = vld [vmem:[%s474 + $0x74] sm:$0xf]
        %v505 = vld [vmem:[%s474 + $0x78] sm:$0xf]
        %v506 = vld [vmem:[%s474 + $0x7c] sm:$0xf]
        %v507 = vld [vmem:[%s474 + $0x80] sm:$0xf]
        %v508 = vld [vmem:[%s474 + $0x84] sm:$0xf]
        %v509 = vld [vmem:[%s474 + $0x88] sm:$0xf]
        %v510 = vld [vmem:[%s474 + $0x8c] sm:$0xf]
        %v511 = vld [vmem:[%s474 + $0x90] sm:$0xf]
        %v512 = vld [vmem:[%s474 + $0x94] sm:$0xf]
        %v513 = vld [vmem:[%s474 + $0x98] sm:$0xf]
        %v514 = vld [vmem:[%s474 + $0x9c] sm:$0xf]
        %v515 = vld [vmem:[%s474 + $0xa0] sm:$0xf]
        %v516 = vld [vmem:[%s474 + $0xa4] sm:$0xf]
        %v517 = vld [vmem:[%s474 + $0xa8] sm:$0xf]
        %v518 = vld [vmem:[%s474 + $0xac] sm:$0xf]
        %v519 = vld [vmem:[%s474 + $0xb0] sm:$0xf]
        %v520 = vld [vmem:[%s474 + $0xb4] sm:$0xf]
        %v521 = vld [vmem:[%s474 + $0xb8] sm:$0xf]
        %v522 = vld [vmem:[%s474 + $0xbc] sm:$0xf]
        %s523 = scalar_lea.vmem %s2, 1
        %v524 = vld [vmem:[%s523] sm:$0x1]
        %v526 = vperm.slane %v524, 0
        %v576 = vunpack.c.l.b16 %v475
        %v577 = vunpack.c.l.b16 %v476
        %v578 = vunpack.c.l.b16 %v477
        %v579 = vunpack.c.l.b16 %v478
        %v580 = vunpack.c.l.b16 %v479
        %v581 = vunpack.c.l.b16 %v480
        %v582 = vunpack.c.l.b16 %v481
        %v583 = vunpack.c.l.b16 %v482
        %v584 = vunpack.c.l.b16 %v483
        %v585 = vunpack.c.l.b16 %v484
        %v586 = vunpack.c.l.b16 %v485
        %v587 = vunpack.c.l.b16 %v486
        %v588 = vunpack.c.l.b16 %v487
        %v589 = vunpack.c.l.b16 %v488
        %v590 = vunpack.c.l.b16 %v489
        %v591 = vunpack.c.l.b16 %v490
        %v592 = vunpack.c.l.b16 %v491
        %v593 = vunpack.c.l.b16 %v492
        %v594 = vunpack.c.l.b16 %v493
        %v595 = vunpack.c.l.b16 %v494
        %v596 = vunpack.c.l.b16 %v495
        %v597 = vunpack.c.l.b16 %v496
        %v598 = vunpack.c.l.b16 %v497
        %v599 = vunpack.c.l.b16 %v498
        %v600 = vunpack.c.l.b16 %v499
        %v601 = vunpack.c.l.b16 %v500
        %v602 = vunpack.c.l.b16 %v501
        %v603 = vunpack.c.l.b16 %v502
        %v604 = vunpack.c.l.b16 %v503
        %v605 = vunpack.c.l.b16 %v504
        %v606 = vunpack.c.l.b16 %v505
        %v607 = vunpack.c.l.b16 %v506
        %v608 = vunpack.c.l.b16 %v507
        %v609 = vunpack.c.l.b16 %v508
        %v610 = vunpack.c.l.b16 %v509
        %v611 = vunpack.c.l.b16 %v510
        %v612 = vunpack.c.l.b16 %v511
        %v613 = vunpack.c.l.b16 %v512
        %v614 = vunpack.c.l.b16 %v513
        %v615 = vunpack.c.l.b16 %v514
        %v616 = vunpack.c.l.b16 %v515
        %v617 = vunpack.c.l.b16 %v516
        %v618 = vunpack.c.l.b16 %v517
        %v619 = vunpack.c.l.b16 %v518
        %v620 = vunpack.c.l.b16 %v519
        %v621 = vunpack.c.l.b16 %v520
        %v622 = vunpack.c.l.b16 %v521
        %v623 = vunpack.c.l.b16 %v522
        %v624 = vpack.c.b16 %v577, %v576
        %v625 = vpack.c.b16 %v579, %v578
        %v626 = vpack.c.b16 %v581, %v580
        %v627 = vpack.c.b16 %v583, %v582
        %v628 = vpack.c.b16 %v585, %v584
        %v629 = vpack.c.b16 %v587, %v586
        %v630 = vpack.c.b16 %v589, %v588
        %v631 = vpack.c.b16 %v591, %v590
        %v632 = vpack.c.b16 %v593, %v592
        %v633 = vpack.c.b16 %v595, %v594
        %v634 = vpack.c.b16 %v597, %v596
        %v635 = vpack.c.b16 %v599, %v598
        %v636 = vpack.c.b16 %v601, %v600
        %v637 = vpack.c.b16 %v603, %v602
        %v638 = vpack.c.b16 %v605, %v604
        %v639 = vpack.c.b16 %v607, %v606
        %v640 = vpack.c.b16 %v609, %v608
        %v641 = vpack.c.b16 %v611, %v610
        %v642 = vpack.c.b16 %v613, %v612
        %v643 = vpack.c.b16 %v615, %v614
        %v644 = vpack.c.b16 %v617, %v616
        %v645 = vpack.c.b16 %v619, %v618
        %v646 = vpack.c.b16 %v621, %v620
        %v647 = vpack.c.b16 %v623, %v622
        %672 = vmatpush.bf16.msra.mxu0 %v631
        %673 = vmatpush.bf16.msra.mxu0 %v630
        %674 = vmatpush.bf16.msra.mxu0 %v629
        %675 = vmatpush.bf16.msra.mxu0 %v628
        %676 = vmatpush.bf16.msra.mxu0 %v627
        %677 = vmatpush.bf16.msra.mxu0 %v626
        %678 = vmatpush.bf16.msra.mxu0 %v625
        %679 = vmatpush.bf16.msra.mxu0 %v624
        %680 = vmatmul.bf16.gmra.mxu0 %v471
        %v681 = vpop.f32.mrf.mxu0
        %v682 = vadd.f32 %v526, %v681
        %v683 = vpop.f32.mrf.mxu0
        %v684 = vadd.f32 %v526, %v683
        %685 = vdwg.mxu0
        %686 = vmatpush.bf16.msra.mxu0 %v639
        %687 = vmatpush.bf16.msra.mxu0 %v638
        %688 = vmatpush.bf16.msra.mxu0 %v637
        %689 = vmatpush.bf16.msra.mxu0 %v636
        %690 = vmatpush.bf16.msra.mxu0 %v635
        %691 = vmatpush.bf16.msra.mxu0 %v634
        %692 = vmatpush.bf16.msra.mxu0 %v633
        %693 = vmatpush.bf16.msra.mxu0 %v632
        %694 = vmatmul.bf16.gmra.mxu0 %v472
        %v695 = vpop.f32.mrf.mxu0
        %v696 = vadd.f32 %v682, %v695
        %v697 = vpop.f32.mrf.mxu0
        %v698 = vadd.f32 %v684, %v697
        %699 = vdwg.mxu0
        %700 = vmatpush.bf16.msra.mxu0 %v647
        %701 = vmatpush.bf16.msra.mxu0 %v646
        %702 = vmatpush.bf16.msra.mxu0 %v645
        %703 = vmatpush.bf16.msra.mxu0 %v644
        %704 = vmatpush.bf16.msra.mxu0 %v643
        %705 = vmatpush.bf16.msra.mxu0 %v642
        %706 = vmatpush.bf16.msra.mxu0 %v641
        %707 = vmatpush.bf16.msra.mxu0 %v640
        %708 = vmatmul.bf16.gmra.mxu0 %v473
        %v709 = vpop.f32.mrf.mxu0
        %v710 = vadd.f32 %v696, %v709
        %v711 = vpop.f32.mrf.mxu0
        %v712 = vadd.f32 %v698, %v711
        %713 = vdwg.mxu0
        %v714 = vmax.f32 %v710, 0.0
        %v715 = vmax.f32 %v712, 0.0
        %v718 = vrot.slane %v714, 2
        %v719 = vrot.slane %v714, 4
        %v720 = vrot.slane %v714, 6
        %v721 = vrot.slane %v715, 2
        %v722 = vrot.slane %v715, 4
        %v723 = vrot.slane %v715, 6
        %vm730 = vcmask 1041408
        %v731 = vsel %vm730, %v714, -inf
        %v732 = vrot.slane %v731, 4
        %v733 = vmax.f32 %v731, %v732
        %v734 = vrot.slane %v733, 2
        %v735 = vmax.f32 %v733, %v734
        %v736 = vrot.slane %v735, 1
        %v737 = vmax.f32 %v735, %v736
        %v738 = vsel %vm730, %v718, -inf
        %v739 = vrot.slane %v738, 4
        %v740 = vmax.f32 %v738, %v739
        %v741 = vrot.slane %v740, 2
        %v742 = vmax.f32 %v740, %v741
        %v743 = vrot.slane %v742, 1
        %v744 = vmax.f32 %v742, %v743
        %v745 = vsel %vm730, %v719, -inf
        %v746 = vrot.slane %v745, 4
        %v747 = vmax.f32 %v745, %v746
        %v748 = vrot.slane %v747, 2
        %v749 = vmax.f32 %v747, %v748
        %v750 = vrot.slane %v749, 1
        %v751 = vmax.f32 %v749, %v750
        %v752 = vsel %vm730, %v720, -inf
        %v753 = vrot.slane %v752, 4
        %v754 = vmax.f32 %v752, %v753
        %v755 = vrot.slane %v754, 2
        %v756 = vmax.f32 %v754, %v755
        %v757 = vrot.slane %v756, 1
        %v758 = vmax.f32 %v756, %v757
        %v759 = vsel %vm730, %v715, -inf
        %v760 = vrot.slane %v759, 4
        %v761 = vmax.f32 %v759, %v760
        %v762 = vrot.slane %v761, 2
        %v763 = vmax.f32 %v761, %v762
        %v764 = vrot.slane %v763, 1
        %v765 = vmax.f32 %v763, %v764
        %v766 = vsel %vm730, %v721, -inf
        %v767 = vrot.slane %v766, 4
        %v768 = vmax.f32 %v766, %v767
        %v769 = vrot.slane %v768, 2
        %v770 = vmax.f32 %v768, %v769
        %v771 = vrot.slane %v770, 1
        %v772 = vmax.f32 %v770, %v771
        %v773 = vsel %vm730, %v722, -inf
        %v774 = vrot.slane %v773, 4
        %v775 = vmax.f32 %v773, %v774
        %v776 = vrot.slane %v775, 2
        %v777 = vmax.f32 %v775, %v776
        %v778 = vrot.slane %v777, 1
        %v779 = vmax.f32 %v777, %v778
        %v780 = vsel %vm730, %v723, -inf
        %v781 = vrot.slane %v780, 4
        %v782 = vmax.f32 %v780, %v781
        %v783 = vrot.slane %v782, 2
        %v784 = vmax.f32 %v782, %v783
        %v785 = vrot.slane %v784, 1
        %v786 = vmax.f32 %v784, %v785
        %vm795 = vcmask 1042434
        %v796 = vsel %vm795, %v744, %v737
        %vm797 = vcmask 1043459
        %v798 = vsel %vm797, %v751, %v796
        %vm799 = vcmask 1044484
        %v800 = vsel %vm799, %v758, %v798
        %vm801 = vcmask 1045509
        %v802 = vsel %vm801, %v765, %v800
        %vm803 = vcmask 1046534
        %v804 = vsel %vm803, %v772, %v802
        %vm805 = vcmask 1047559
        %v806 = vsel %vm805, %v779, %v804
        %v809 = vsel %vm175, 0.0, %v806
        %v810 = vsel %vm175, %v786, 0.0
        %v813 = vrot.slane %v809, 1
        %v814 = vrot.slane %v810, 1
        %v815 = vsel %vm186, %v813, %v814
        %v817 = vrot.slane %v809, 2
        %v818 = vrot.slane %v810, 2
        %v819 = vsel %vm194, %v817, %v818
        %v821 = vpack.c.bf16 %v809, %v809
        %v822 = vpack.c.bf16 %v815, %v815
        %v823 = vpack.c.bf16 %v819, %v819
        %s824 = scalar_lea.vmem %s1, 384
        %v825 = vld [vmem:[%s824] sm:$0xf]
        %v826 = vld [vmem:[%s824 + $0x4] sm:$0xf]
        %v827 = vld [vmem:[%s824 + $0x8] sm:$0xf]
        %v828 = vld [vmem:[%s824 + $0xc] sm:$0xf]
        %v829 = vld [vmem:[%s824 + $0x10] sm:$0xf]
        %v830 = vld [vmem:[%s824 + $0x14] sm:$0xf]
        %v831 = vld [vmem:[%s824 + $0x18] sm:$0xf]
        %v832 = vld [vmem:[%s824 + $0x1c] sm:$0xf]
        %v833 = vld [vmem:[%s824 + $0x20] sm:$0xf]
        %v834 = vld [vmem:[%s824 + $0x24] sm:$0xf]
        %v835 = vld [vmem:[%s824 + $0x28] sm:$0xf]
        %v836 = vld [vmem:[%s824 + $0x2c] sm:$0xf]
        %v837 = vld [vmem:[%s824 + $0x30] sm:$0xf]
        %v838 = vld [vmem:[%s824 + $0x34] sm:$0xf]
        %v839 = vld [vmem:[%s824 + $0x38] sm:$0xf]
        %v840 = vld [vmem:[%s824 + $0x3c] sm:$0xf]
        %v841 = vld [vmem:[%s824 + $0x40] sm:$0xf]
        %v842 = vld [vmem:[%s824 + $0x44] sm:$0xf]
        %v843 = vld [vmem:[%s824 + $0x48] sm:$0xf]
        %v844 = vld [vmem:[%s824 + $0x4c] sm:$0xf]
        %v845 = vld [vmem:[%s824 + $0x50] sm:$0xf]
        %v846 = vld [vmem:[%s824 + $0x54] sm:$0xf]
        %v847 = vld [vmem:[%s824 + $0x58] sm:$0xf]
        %v848 = vld [vmem:[%s824 + $0x5c] sm:$0xf]
        %v849 = vld [vmem:[%s824 + $0x60] sm:$0xf]
        %v850 = vld [vmem:[%s824 + $0x64] sm:$0xf]
        %v851 = vld [vmem:[%s824 + $0x68] sm:$0xf]
        %v852 = vld [vmem:[%s824 + $0x6c] sm:$0xf]
        %v853 = vld [vmem:[%s824 + $0x70] sm:$0xf]
        %v854 = vld [vmem:[%s824 + $0x74] sm:$0xf]
        %v855 = vld [vmem:[%s824 + $0x78] sm:$0xf]
        %v856 = vld [vmem:[%s824 + $0x7c] sm:$0xf]
        %v857 = vld [vmem:[%s824 + $0x80] sm:$0xf]
        %v858 = vld [vmem:[%s824 + $0x84] sm:$0xf]
        %v859 = vld [vmem:[%s824 + $0x88] sm:$0xf]
        %v860 = vld [vmem:[%s824 + $0x8c] sm:$0xf]
        %v861 = vld [vmem:[%s824 + $0x90] sm:$0xf]
        %v862 = vld [vmem:[%s824 + $0x94] sm:$0xf]
        %v863 = vld [vmem:[%s824 + $0x98] sm:$0xf]
        %v864 = vld [vmem:[%s824 + $0x9c] sm:$0xf]
        %v865 = vld [vmem:[%s824 + $0xa0] sm:$0xf]
        %v866 = vld [vmem:[%s824 + $0xa4] sm:$0xf]
        %v867 = vld [vmem:[%s824 + $0xa8] sm:$0xf]
        %v868 = vld [vmem:[%s824 + $0xac] sm:$0xf]
        %v869 = vld [vmem:[%s824 + $0xb0] sm:$0xf]
        %v870 = vld [vmem:[%s824 + $0xb4] sm:$0xf]
        %v871 = vld [vmem:[%s824 + $0xb8] sm:$0xf]
        %v872 = vld [vmem:[%s824 + $0xbc] sm:$0xf]
        %s873 = scalar_lea.vmem %s2, 2
        %v874 = vld [vmem:[%s873] sm:$0x1]
        %v876 = vperm.slane %v874, 0
        %v926 = vunpack.c.l.b16 %v825
        %v927 = vunpack.c.l.b16 %v826
        %v928 = vunpack.c.l.b16 %v827
        %v929 = vunpack.c.l.b16 %v828
        %v930 = vunpack.c.l.b16 %v829
        %v931 = vunpack.c.l.b16 %v830
        %v932 = vunpack.c.l.b16 %v831
        %v933 = vunpack.c.l.b16 %v832
        %v934 = vunpack.c.l.b16 %v833
        %v935 = vunpack.c.l.b16 %v834
        %v936 = vunpack.c.l.b16 %v835
        %v937 = vunpack.c.l.b16 %v836
        %v938 = vunpack.c.l.b16 %v837
        %v939 = vunpack.c.l.b16 %v838
        %v940 = vunpack.c.l.b16 %v839
        %v941 = vunpack.c.l.b16 %v840
        %v942 = vunpack.c.l.b16 %v841
        %v943 = vunpack.c.l.b16 %v842
        %v944 = vunpack.c.l.b16 %v843
        %v945 = vunpack.c.l.b16 %v844
        %v946 = vunpack.c.l.b16 %v845
        %v947 = vunpack.c.l.b16 %v846
        %v948 = vunpack.c.l.b16 %v847
        %v949 = vunpack.c.l.b16 %v848
        %v950 = vunpack.c.l.b16 %v849
        %v951 = vunpack.c.l.b16 %v850
        %v952 = vunpack.c.l.b16 %v851
        %v953 = vunpack.c.l.b16 %v852
        %v954 = vunpack.c.l.b16 %v853
        %v955 = vunpack.c.l.b16 %v854
        %v956 = vunpack.c.l.b16 %v855
        %v957 = vunpack.c.l.b16 %v856
        %v958 = vunpack.c.l.b16 %v857
        %v959 = vunpack.c.l.b16 %v858
        %v960 = vunpack.c.l.b16 %v859
        %v961 = vunpack.c.l.b16 %v860
        %v962 = vunpack.c.l.b16 %v861
        %v963 = vunpack.c.l.b16 %v862
        %v964 = vunpack.c.l.b16 %v863
        %v965 = vunpack.c.l.b16 %v864
        %v966 = vunpack.c.l.b16 %v865
        %v967 = vunpack.c.l.b16 %v866
        %v968 = vunpack.c.l.b16 %v867
        %v969 = vunpack.c.l.b16 %v868
        %v970 = vunpack.c.l.b16 %v869
        %v971 = vunpack.c.l.b16 %v870
        %v972 = vunpack.c.l.b16 %v871
        %v973 = vunpack.c.l.b16 %v872
        %v974 = vpack.c.b16 %v927, %v926
        %v975 = vpack.c.b16 %v929, %v928
        %v976 = vpack.c.b16 %v931, %v930
        %v977 = vpack.c.b16 %v933, %v932
        %v978 = vpack.c.b16 %v935, %v934
        %v979 = vpack.c.b16 %v937, %v936
        %v980 = vpack.c.b16 %v939, %v938
        %v981 = vpack.c.b16 %v941, %v940
        %v982 = vpack.c.b16 %v943, %v942
        %v983 = vpack.c.b16 %v945, %v944
        %v984 = vpack.c.b16 %v947, %v946
        %v985 = vpack.c.b16 %v949, %v948
        %v986 = vpack.c.b16 %v951, %v950
        %v987 = vpack.c.b16 %v953, %v952
        %v988 = vpack.c.b16 %v955, %v954
        %v989 = vpack.c.b16 %v957, %v956
        %v990 = vpack.c.b16 %v959, %v958
        %v991 = vpack.c.b16 %v961, %v960
        %v992 = vpack.c.b16 %v963, %v962
        %v993 = vpack.c.b16 %v965, %v964
        %v994 = vpack.c.b16 %v967, %v966
        %v995 = vpack.c.b16 %v969, %v968
        %v996 = vpack.c.b16 %v971, %v970
        %v997 = vpack.c.b16 %v973, %v972
        %1022 = vmatpush.bf16.msra.mxu0 %v981
        %1023 = vmatpush.bf16.msra.mxu0 %v980
        %1024 = vmatpush.bf16.msra.mxu0 %v979
        %1025 = vmatpush.bf16.msra.mxu0 %v978
        %1026 = vmatpush.bf16.msra.mxu0 %v977
        %1027 = vmatpush.bf16.msra.mxu0 %v976
        %1028 = vmatpush.bf16.msra.mxu0 %v975
        %1029 = vmatpush.bf16.msra.mxu0 %v974
        %1030 = vmatmul.bf16.gmra.mxu0 %v821
        %v1031 = vpop.f32.mrf.mxu0
        %v1032 = vadd.f32 %v876, %v1031
        %v1033 = vpop.f32.mrf.mxu0
        %1034 = vdwg.mxu0
        %1035 = vmatpush.bf16.msra.mxu0 %v989
        %1036 = vmatpush.bf16.msra.mxu0 %v988
        %1037 = vmatpush.bf16.msra.mxu0 %v987
        %1038 = vmatpush.bf16.msra.mxu0 %v986
        %1039 = vmatpush.bf16.msra.mxu0 %v985
        %1040 = vmatpush.bf16.msra.mxu0 %v984
        %1041 = vmatpush.bf16.msra.mxu0 %v983
        %1042 = vmatpush.bf16.msra.mxu0 %v982
        %1043 = vmatmul.bf16.gmra.mxu0 %v822
        %v1044 = vpop.f32.mrf.mxu0
        %v1045 = vadd.f32 %v1032, %v1044
        %v1046 = vpop.f32.mrf.mxu0
        %1047 = vdwg.mxu0
        %1048 = vmatpush.bf16.msra.mxu0 %v997
        %1049 = vmatpush.bf16.msra.mxu0 %v996
        %1050 = vmatpush.bf16.msra.mxu0 %v995
        %1051 = vmatpush.bf16.msra.mxu0 %v994
        %1052 = vmatpush.bf16.msra.mxu0 %v993
        %1053 = vmatpush.bf16.msra.mxu0 %v992
        %1054 = vmatpush.bf16.msra.mxu0 %v991
        %1055 = vmatpush.bf16.msra.mxu0 %v990
        %1056 = vmatmul.bf16.gmra.mxu0 %v823
        %v1057 = vpop.f32.mrf.mxu0
        %v1058 = vadd.f32 %v1045, %v1057
        %v1059 = vpop.f32.mrf.mxu0
        %1060 = vdwg.mxu0
        %v1061 = vmax.f32 %v1058, 0.0
        %v1063 = vrot.slane %v1061, 2
        %v1064 = vrot.slane %v1061, 4
        %v1065 = vrot.slane %v1061, 6
        %v1069 = vsel %vm730, %v1061, -inf
        %v1070 = vrot.slane %v1069, 4
        %v1071 = vmax.f32 %v1069, %v1070
        %v1072 = vrot.slane %v1071, 2
        %v1073 = vmax.f32 %v1071, %v1072
        %v1074 = vrot.slane %v1073, 1
        %v1075 = vmax.f32 %v1073, %v1074
        %v1076 = vsel %vm730, %v1063, -inf
        %v1077 = vrot.slane %v1076, 4
        %v1078 = vmax.f32 %v1076, %v1077
        %v1079 = vrot.slane %v1078, 2
        %v1080 = vmax.f32 %v1078, %v1079
        %v1081 = vrot.slane %v1080, 1
        %v1082 = vmax.f32 %v1080, %v1081
        %v1083 = vsel %vm730, %v1064, -inf
        %v1084 = vrot.slane %v1083, 4
        %v1085 = vmax.f32 %v1083, %v1084
        %v1086 = vrot.slane %v1085, 2
        %v1087 = vmax.f32 %v1085, %v1086
        %v1088 = vrot.slane %v1087, 1
        %v1089 = vmax.f32 %v1087, %v1088
        %v1090 = vsel %vm730, %v1065, -inf
        %v1091 = vrot.slane %v1090, 4
        %v1092 = vmax.f32 %v1090, %v1091
        %v1093 = vrot.slane %v1092, 2
        %v1094 = vmax.f32 %v1092, %v1093
        %v1095 = vrot.slane %v1094, 1
        %v1096 = vmax.f32 %v1094, %v1095
        %vm1101 = vcmask 1041409
        %v1102 = vsel %vm1101, %v1082, %v1075
        %v1103 = vsel %vm795, %v1089, %v1102
        %v1104 = vsel %vm797, %v1096, %v1103
        %1106 = vst [vmem:[%s163] sm:$0xf] %v1104
        %s1107 = sand.u32 %s93, 1
        %s1108 = scalar_lea.sflag [#allocation3], %s1107
        %s1109 = sand.u32 %s93, 1
        %s1110 = smul.addr %s1109, 4
        %s1111 = scalar_lea.vmem [#allocation2], %s1110
        // Predicated region
        $region33: #{feature_extractor_forward.1} parent=31 // pred_check
          %p1112 = pneg %p103
        $region34: #{feature_extractor_forward.1} parent=31 // pred_check_branch
          %1114 = sbr.rel (%p1112) target = $region36
        $region35: #{feature_extractor_forward.1} parent=31 // pred_region
          %1116 = vsyncadd %s1108, 0
          %s1117 = smul.addr %s17, 4
          %s1118 = scalar_lea.hbm %s3, %s1117
          %s1120 = sshll.u32 %s1111, 4
          %s1121 = int_to_ptr.vmem [resolvable:$true] %s1120
          %s1122 = sshll.u32 %s1118, 4
          %s1123 = int_to_ptr.hbm [resolvable:$true] %s1122
          %1125 = dma.vmem_to_hbm [thread:$0]  %s1121, 64, %s1123, %s1108
        $region36: #{feature_extractor_forward.1} parent=31 // pred_fallthru
          _
      $region32: #{feature_extractor_forward.1} parent=5 // pred_fallthru
        _
      %p1126 = scmp.le.s32.totalorder 2, %s12
      // Predicated region
      $region37: #{feature_extractor_forward.1} parent=5 // pred_check
        %p1127 = pneg %p1126
      $region38: #{feature_extractor_forward.1} parent=5 // pred_check_branch
        %1129 = sbr.rel (%p1127) target = $region40
      $region39: #{feature_extractor_forward.1} parent=5 // pred_region
        %s1130 = ssub.s32 %s12, 2
        // Predicated region
        $region41: #{feature_extractor_forward.1} parent=39 // pred_check
          %p1131 = pneg %p109
        $region42: #{feature_extractor_forward.1} parent=39 // pred_check_branch
          %1133 = sbr.rel (%p1131) target = $region44
        $region43: #{feature_extractor_forward.1} parent=39 // pred_region
          %s1134 = sand.u32 %s94, 1
          %s1135 = scalar_lea.sflag [#allocation3], %s1134
          %s1136 = sand.u32 %s94, 1
          %s1137 = smul.addr %s1136, 4
          %s1138 = scalar_lea.vmem [#allocation2], %s1137
          %1140 = dma.done %s1135, 64
        $region44: #{feature_extractor_forward.1} parent=39 // pred_fallthru
          _
      $region40: #{feature_extractor_forward.1} parent=5 // pred_fallthru
        _
    $region6: #{feature_extractor_forward.1} parent=1 // loop_footer
      %s16 = sadd.s32 1, %s12
    $region7: #{feature_extractor_forward.1} parent=1 // loop_footer_branch
      %11 = sbr.rel target = $region3
    $region8: #{feature_extractor_forward.1} parent=1 // loop_exit
      _
    %1141 = vsyncpa [#allocation3], 1
    %s1142 = scalar_lea.sflag [#allocation3], 1
    %1143 = vsyncpa %s1142, 1

</llo_original>
